<compile_context>
chip_gen: v6e
topology: v6e:2x2x1
jax: 0.10.0
libtpu: 0.0.40
codegen_flags: <defaults>
</compile_context>

<pallas_src>
import jax
import jax.numpy as jnp
from jax.experimental import pallas as pl
from jax.experimental.pallas import tpu as pltpu


# ---------------------------------------------------------------------------
# Small helpers
# ---------------------------------------------------------------------------
def _round_up(x, m):
    return ((x + m - 1) // m) * m


def _pad2d(x, rows, cols):
    r, c = x.shape
    if r == rows and c == cols:
        return x
    return jnp.pad(x, ((0, rows - r), (0, cols - c)))


def _maybe_pad_cast(x, rows, cols, dtype):
    """Skip the extra HBM round trip when the array is already padded+typed."""
    if x.shape == (rows, cols) and x.dtype == jnp.dtype(dtype):
        return x
    return _pad2d(x, rows, cols).astype(dtype)


def _pick_block(target, total):
    """Largest multiple of 128 <= target that divides `total` (total % 128 == 0)."""
    target = max(128, min(target, total))
    best = 128
    b = 128
    while b <= target:
        if total % b == 0:
            best = b
        b += 128
    return best


def _vmem_budget_bytes():
    """Per-generation VMEM budget (v5e/v6e: 128 MiB physical, v7x: 64 MiB)."""
    try:
        cap = getattr(pltpu.get_tpu_info(), "vmem_capacity_bytes", None)
        if cap:
            return int(cap * 3 // 4)
    except Exception:
        pass
    return 48 * 1024 * 1024  # conservative: fits v7x's 64 MiB VMEM


def _resident_spec(block_shape, index_map):
    """Constant-index operand: fetched once; single-buffer it to save VMEM."""
    if hasattr(pl, "Buffered"):
        try:
            return pl.BlockSpec(block_shape, index_map,
                                pipeline_mode=pl.Buffered(1))
        except TypeError:
            pass
    return pl.BlockSpec(block_shape, index_map)


# ---------------------------------------------------------------------------
# Kernels
# ---------------------------------------------------------------------------
def _gcn_axw_kernel(adj_ref, x_ref, w_ref, b_ref, out_ref, acc_ref):
    """Row tile of ((A @ X) @ W) + b.  Grid = (row_tiles, k_tiles); k reduces N."""
    k = pl.program_id(1)

    @pl.when(k == 0)
    def _init():
        acc_ref[...] = jnp.zeros_like(acc_ref)

    # acc (bm, d_in_p) += A_tile (bm, bk) @ X_tile (bk, d_in_p)   [MXU, f32 acc]
    acc_ref[...] += jnp.dot(adj_ref[...], x_ref[...],
                            preferred_element_type=jnp.float32)

    @pl.when(k == pl.num_programs(1) - 1)
    def _finalize():
        # Keep the accumulated A@X in f32 for the second matmul (W is f32):
        # no bf16 re-rounding of the accumulator.
        out_ref[...] = (
            jnp.dot(acc_ref[...], w_ref[...], preferred_element_type=jnp.float32)
            + b_ref[...]
        ).astype(out_ref.dtype)


def _make_as_kernel(bk, resident):
    """(A @ support) + b, accumulating directly into the resident f32 output."""

    def kernel(adj_ref, s_ref, b_ref, out_ref):
        k = pl.program_id(1)

        @pl.when(k == 0)
        def _init():
            # Fold the bias into the output init -> no separate post-add pass.
            out_ref[...] = jnp.broadcast_to(b_ref[...], out_ref.shape)

        if resident:
            # Full support resident in VMEM (DMA'd once); slice the k-th block.
            start = pl.multiple_of(k * bk, 128)
            s = s_ref[pl.ds(start, bk), :]
        else:
            s = s_ref[...]
        out_ref[...] += jnp.dot(adj_ref[...], s,
                                preferred_element_type=jnp.float32)

    return kernel


def _support_kernel(x_ref, w_ref, s_ref):
    """support row tile = X_tile @ W (computed once, reused by every A row tile)."""
    s_ref[...] = jnp.dot(x_ref[...].astype(jnp.float32), w_ref[...],
                         preferred_element_type=jnp.float32).astype(s_ref.dtype)


# ---------------------------------------------------------------------------
# Wrapper
# ---------------------------------------------------------------------------
def gcn_forward(adjacency, input_feature, weight, bias=None, *,
                block_m=512, block_k=512, matmul_dtype=jnp.bfloat16):
    """GCN layer: (A @ (X @ W)) + b, tiled over rows of A and the N axis."""
    n, d_in = input_feature.shape
    d_in_w, d_out = weight.shape
    assert d_in_w == d_in
    assert adjacency.shape == (n, n)

    d_in_p = _round_up(d_in, 128)
    d_out_p = _round_up(d_out, 128)
    n_p = _round_up(n, 128)          # pad N to 128 only (not to the tile size)

    mm_dt = jnp.dtype(matmul_dtype)
    a_item = mm_dt.itemsize

    # --- tile selection ----------------------------------------------------
    bm = _pick_block(block_m, n_p)
    if n_p // bm < 2 and n_p >= 256:
        # v7x megacore: make sure the "parallel" row axis spans both TCs.
        bm = _pick_block(bm // 2, n_p)
    bk = _pick_block(block_k, n_p)

    # --- operands (skip the pad/cast HBM round trip when possible) ----------
    adj_p = _maybe_pad_cast(adjacency, n_p, n_p, mm_dt)
    x_p = _maybe_pad_cast(input_feature, n_p, d_in_p, mm_dt)
    w_p = _maybe_pad_cast(weight, d_in_p, d_out_p, jnp.float32)   # W stays f32
    if bias is None:
        b_p = jnp.zeros((1, d_out_p), jnp.float32)
    else:
        b_p = jnp.pad(bias.astype(jnp.float32),
                      (0, d_out_p - d_out)).reshape(1, d_out_p)

    # --- path choice: keep the big N^2 matmul at full MXU output width ------
    # (256-lane MXU on v6e/v7x; on a tie prefer A@support: no per-row-tile
    #  finalize matmul and the support is DMA'd once when resident.)
    mxu_lanes = 256
    use_axw = pl.cdiv(d_in_p, mxu_lanes) < pl.cdiv(d_out_p, mxu_lanes)

    vmem_budget = _vmem_budget_bytes()

    if use_axw:
        # -------- fused ((A @ X) @ W) + b --------------------------------
        def need(bm_, bk_):
            return (2 * bm_ * bk_ * a_item          # A tiles (double-buffered)
                    + 2 * bk_ * d_in_p * a_item      # X tiles
                    + d_in_p * d_out_p * 4           # W (single-buffered)
                    + 2 * d_out_p * 4                # bias
                    + 2 * bm_ * d_out_p * 4          # output tiles
                    + bm_ * d_in_p * 4)              # f32 accumulator

        while need(bm, bk) > vmem_budget and (bm > 128 or bk > 128):
            if bk >= bm and bk > 128:
                bk = _pick_block(bk // 2, n_p)
            else:
                bm = _pick_block(bm // 2, n_p)

        grid = (n_p // bm, n_p // bk)
        vmem_limit = int(min(vmem_budget,
                             max(need(bm, bk) + (4 << 20), 16 << 20)))
        cost = pl.CostEstimate(
            flops=2 * n_p * n_p * d_in_p + 2 * n_p * d_in_p * d_out_p,
            bytes_accessed=(n_p * n_p * a_item
                            + grid[0] * n_p * d_in_p * a_item
                            + d_in_p * d_out_p * 4
                            + n_p * d_out_p * 4),
            transcendentals=0,
        )
        out_p = pl.pallas_call(
            _gcn_axw_kernel,
            out_shape=jax.ShapeDtypeStruct((n_p, d_out_p), jnp.float32),
            grid_spec=pltpu.PrefetchScalarGridSpec(
                num_scalar_prefetch=0,
                grid=grid,
                in_specs=[
                    pl.BlockSpec((bm, bk), lambda i, k: (i, k)),            # A
                    pl.BlockSpec((bk, d_in_p), lambda i, k: (k, 0)),        # X
                    _resident_spec((d_in_p, d_out_p), lambda i, k: (0, 0)),  # W
                    pl.BlockSpec((1, d_out_p), lambda i, k: (0, 0)),         # bias
                ],
                out_specs=pl.BlockSpec((bm, d_out_p), lambda i, k: (i, 0)),
                scratch_shapes=[pltpu.VMEM((bm, d_in_p), jnp.float32)],
            ),
            compiler_params=pltpu.CompilerParams(
                dimension_semantics=("parallel", "arbitrary"),
                vmem_limit_bytes=vmem_limit,
            ),
            cost_estimate=cost,
        )(adj_p, x_p, w_p, b_p)
    else:
        # -------- support = X @ W once, then (A @ support) + b -------------
        support = pl.pallas_call(
            _support_kernel,
            out_shape=jax.ShapeDtypeStruct((n_p, d_out_p), mm_dt),
            grid_spec=pltpu.PrefetchScalarGridSpec(
                num_scalar_prefetch=0,
                grid=(n_p // bk,),
                in_specs=[
                    pl.BlockSpec((bk, d_in_p), lambda i: (i, 0)),
                    _resident_spec((d_in_p, d_out_p), lambda i: (0, 0)),
                ],
                out_specs=pl.BlockSpec((bk, d_out_p), lambda i: (i, 0)),
            ),
            compiler_params=pltpu.CompilerParams(
                dimension_semantics=("parallel",),
                vmem_limit_bytes=32 * 1024 * 1024,
            ),
        )(x_p, w_p)

        support_bytes = n_p * d_out_p * a_item
        resident = support_bytes <= min(8 << 20, vmem_budget // 4)

        def need(bm_, bk_):
            s_buf = support_bytes if resident else 2 * bk_ * d_out_p * a_item
            return (2 * bm_ * bk_ * a_item       # A tiles (double-buffered)
                    + s_buf                      # support (resident / streamed)
                    + 2 * d_out_p * 4            # bias
                    + 2 * bm_ * d_out_p * 4)     # output (doubles as accumulator)

        while need(bm, bk) > vmem_budget and (bm > 128 or bk > 128):
            if bk >= bm and bk > 128:
                bk = _pick_block(bk // 2, n_p)
            else:
                bm = _pick_block(bm // 2, n_p)

        grid = (n_p // bm, n_p // bk)
        vmem_limit = int(min(vmem_budget,
                             max(need(bm, bk) + (4 << 20), 16 << 20)))

        if resident:
            s_spec = _resident_spec((n_p, d_out_p), lambda i, k: (0, 0))
        else:
            s_spec = pl.BlockSpec((bk, d_out_p), lambda i, k: (k, 0))

        cost = pl.CostEstimate(
            flops=2 * n_p * n_p * d_out_p,
            bytes_accessed=(n_p * n_p * a_item
                            + (support_bytes if resident
                               else grid[0] * n_p * d_out_p * a_item)
                            + n_p * d_out_p * 4),
            transcendentals=0,
        )
        out_p = pl.pallas_call(
            _make_as_kernel(bk, resident),
            out_shape=jax.ShapeDtypeStruct((n_p, d_out_p), jnp.float32),
            grid_spec=pltpu.PrefetchScalarGridSpec(
                num_scalar_prefetch=0,
                grid=grid,
                in_specs=[
                    pl.BlockSpec((bm, bk), lambda i, k: (i, k)),     # A
                    s_spec,                                          # support
                    pl.BlockSpec((1, d_out_p), lambda i, k: (0, 0)),  # bias
                ],
                out_specs=pl.BlockSpec((bm, d_out_p), lambda i, k: (i, 0)),
            ),
            compiler_params=pltpu.CompilerParams(
                dimension_semantics=("parallel", "arbitrary"),
                vmem_limit_bytes=vmem_limit,
            ),
            cost_estimate=cost,
        )(adj_p, support, b_p)

    return out_p[:n, :d_out]


# ---------------------------------------------------------------------------
# Parameter init (mirrors the PyTorch module) + reference
# ---------------------------------------------------------------------------
def init_params(key, input_dim, output_dim):
    # torch.nn.init.kaiming_uniform_ default on a (input_dim, output_dim)
    # tensor: fan_in = weight.shape[1] = output_dim, gain = sqrt(2),
    # bound = gain * sqrt(3 / fan_in) = sqrt(6 / output_dim).
    bound = jnp.sqrt(6.0 / output_dim)
    weight = jax.random.uniform(
        key, (input_dim, output_dim), minval=-bound, maxval=bound,
        dtype=jnp.float32)
    bias = jnp.zeros((output_dim,), dtype=jnp.float32)
    return weight, bias


def reference_gcn(adjacency, input_feature, weight, bias):
    support = jnp.dot(input_feature, weight, precision=jax.lax.Precision.HIGHEST)
    out = jnp.dot(adjacency, support, precision=jax.lax.Precision.HIGHEST)
    return out + bias[None, :]


def _rel_err(a, b):
    return float(jnp.linalg.norm(a - b) / (jnp.linalg.norm(b) + 1e-12))


if __name__ == "__main__":
    key = jax.random.PRNGKey(0)
    k = jax.random.split(key, 9)

    def make_case(ka, kx, kw, n, d_in, d_out):
        adjacency = jax.random.uniform(ka, (n, n), dtype=jnp.float32) / n
        x = jax.random.normal(kx, (n, d_in), dtype=jnp.float32)
        weight, bias = init_params(kw, d_in, d_out)
        return adjacency, x, weight, bias

    # --- Test 1: A@support path, bf16 default, resident support, 2 row tiles.
    adj1, x1, w1, b1 = make_case(k[0], k[1], k[2], 256, 64, 96)
    out1 = jax.block_until_ready(gcn_forward(adj1, x1, w1, b1))
    ref1 = reference_gcn(adj1, x1, w1, b1)
    assert out1.shape == (256, 96)
    assert _rel_err(out1, ref1) < 2e-2, _rel_err(out1, ref1)

    # --- Test 2: fused (A@X)@W path (d_out_p needs 2 MXU passes), bf16. -----
    adj2, x2, w2, b2 = make_case(k[3], k[4], k[5], 384, 128, 320)
    out2 = jax.block_until_ready(gcn_forward(adj2, x2, w2, b2))
    ref2 = reference_gcn(adj2, x2, w2, b2)
    assert out2.shape == (384, 320)
    assert _rel_err(out2, ref2) < 2e-2, _rel_err(out2, ref2)

    # --- Test 3: f32 matmul dtype, unaligned D_in, single-tile grid. --------
    adj3, x3, w3, b3 = make_case(k[6], k[7], k[8], 128, 96, 128)
    out3 = jax.block_until_ready(
        gcn_forward(adj3, x3, w3, b3, matmul_dtype=jnp.float32))
    ref3 = reference_gcn(adj3, x3, w3, b3)
    assert out3.shape == (128, 128)
    assert _rel_err(out3, ref3) < 1e-4, _rel_err(out3, ref3)

    print("KERNEL_OK")
</pallas_src>

<mosaic_0001>
module attributes {stable_mosaic.version = 11 : i64} {
  func.func @_support_kernel(%arg0: i32, %arg1: memref<256x128xbf16, #tpu.memory_space<vmem>>, %arg2: memref<128x128xf32, #tpu.memory_space<vmem>>, %arg3: memref<256x128xbf16, #tpu.memory_space<vmem>>) attributes {dimension_semantics = [#tpu.dimension_semantics<parallel>], iteration_bounds = array<i64: 1>, scalar_prefetch = 0 : i64, scratch_operands = 0 : i64, tpu.core_type = #tpu.core_type<tc>, window_params = [{transform_indices = @transform_0, window_bounds = array<i64: 256, 128>}, {pipeline_mode = #tpu.pipeline_mode<synchronous>, transform_indices = @transform_1, window_bounds = array<i64: 128, 128>}, {transform_indices = @transform_2, window_bounds = array<i64: 256, 128>}]} {
    %c0 = arith.constant 0 : index
    %c0_0 = arith.constant 0 : index
    %0 = vector.load %arg1[%c0, %c0_0] : memref<256x128xbf16, #tpu.memory_space<vmem>>, vector<256x128xbf16>
    %1 = arith.extf %0 : vector<256x128xbf16> to vector<256x128xf32>
    %c0_1 = arith.constant 0 : index
    %c0_2 = arith.constant 0 : index
    %2 = vector.load %arg2[%c0_1, %c0_2] : memref<128x128xf32, #tpu.memory_space<vmem>>, vector<128x128xf32>
    %cst = arith.constant dense<0.000000e+00> : vector<256x128xf32>
    %3 = tpu.matmul %1, %2, %cst {dimension_numbers = #tpu.dot_dimension_numbers<[1], [0], [0], [1], [0, 0, 1, 1], [], []>} : vector<256x128xf32>, vector<128x128xf32>, vector<256x128xf32> -> vector<256x128xf32>
    %4 = arith.truncf %3 : vector<256x128xf32> to vector<256x128xbf16>
    %c0_3 = arith.constant 0 : index
    %c0_4 = arith.constant 0 : index
    %5 = vector.load %arg3[%c0_3, %c0_4] : memref<256x128xbf16, #tpu.memory_space<vmem>>, vector<256x128xbf16>
    tpu.vector_store %arg3[%c0_3, %c0_4], %4 {strides = array<i32>} : memref<256x128xbf16, #tpu.memory_space<vmem>>, vector<256x128xbf16>,
    return
  }
  func.func @transform_0(%arg0: i32) -> (i32, i32) {
    %c0_i32 = arith.constant 0 : i32
    %c0_i32_0 = arith.constant 0 : i32
    return %arg0, %c0_i32 : i32, i32
  }
  func.func @transform_1(%arg0: i32) -> (i32, i32) {
    %c0_i32 = arith.constant 0 : i32
    %c0_i32_0 = arith.constant 0 : i32
    %c0_i32_1 = arith.constant 0 : i32
    return %c0_i32, %c0_i32_0 : i32, i32
  }
  func.func @transform_2(%arg0: i32) -> (i32, i32) {
    %c0_i32 = arith.constant 0 : i32
    %c0_i32_0 = arith.constant 0 : i32
    return %arg0, %c0_i32 : i32, i32
  }
}

</mosaic_0001>

<llo_original>
// kernel: tpu_custom_call.1
$region0: #{tpu_custom_call.1}
  #allocation0 [shape = 'u32[]', space=smem, size = 0x4, offset = 0x4, fixed_abs, tag = 'smem constant byte address 0x4 - core index']
  #allocation1 [shape = 'u32[144,128]{1,0:T(1,128)}', space=vmem, size = 0x12000, scoped, tag = 'internal scratch']
  %s0 = inlined_call_operand.hbm [shape: bf16[256,128], index: 0, kind: input, shape index: {}]
  %s1 = inlined_call_operand.hbm [shape: f32[128,128], index: 1, kind: input, shape index: {}]
  %s2 = inlined_call_operand.hbm [shape: bf16[256,128], index: 2, kind: output, shape index: {}]
  %s3 = sld [smem:[#allocation0]]
  $region26: #{tpu_custom_call.1} parent=0
    _
  %s5 = ssub.s32 1, %s3
  %s6 = scalar_select 0, %s5, %s3
  $region1: #{tpu_custom_call.1} parent=0
    #allocation2 [shape = 'u8[65536]{0}', space=vmem, size = 0x10000, scoped, tag = 'input window, operand 0, single buffered']
    #allocation3 [shape = 's32[1]{0}', space=sflag, size = 0x4, scoped, tag = 'scoped memory for tpu_custom_call.1']
    #allocation4 [shape = 's32[1]{0}', space=sflag, size = 0x4, scoped, tag = 'scoped memory for tpu_custom_call.1']
    #allocation5 [shape = 'u8[65536]{0}', space=vmem, size = 0x10000, scoped, tag = 'input window, operand 1, single buffered']
    #allocation6 [shape = 's32[1]{0}', space=sflag, size = 0x4, scoped, tag = 'scoped memory for tpu_custom_call.1']
    #allocation7 [shape = 'u8[65536]{0}', space=vmem, size = 0x10000, scoped, tag = 'output window, operand 0, single buffered']
    %7 = vsyncpa [#allocation3], 0
    %8 = vsyncpa [#allocation6], 0
    %9 = vsyncpa [#allocation4], 0
    // Predicated region
    $region2: #{tpu_custom_call.1} parent=1 // pred_check
      _
    $region3: #{tpu_custom_call.1} parent=1 // pred_check_branch
      %11 = sbr.rel (0) target = $region5
    $region4: #{tpu_custom_call.1} parent=1 // pred_region
      %s13 = ssub.s32 2048, 2048
      %14 = vsyncadd [#allocation3], %s13
      %s15 = sshll.u32 [#allocation2], 4
      %s16 = int_to_ptr.vmem [resolvable:$true] %s15
      %21 = dma.hbm_to_vmem [thread:$0]  %s0, 2048, %s16, [#allocation3], 64, 64, 4
    $region5: #{tpu_custom_call.1} parent=1 // pred_fallthru
      _
    // Predicated region
    $region6: #{tpu_custom_call.1} parent=1 // pred_check
      _
    $region7: #{tpu_custom_call.1} parent=1 // pred_check_branch
      %23 = sbr.rel (0) target = $region9
    $region8: #{tpu_custom_call.1} parent=1 // pred_region
      %s25 = ssub.s32 2048, 2048
      %26 = vsyncadd [#allocation6], %s25
      %s27 = sshll.u32 [#allocation5], 4
      %s28 = int_to_ptr.vmem [resolvable:$true] %s27
      %33 = dma.hbm_to_vmem [thread:$0]  %s1, 2048, %s28, [#allocation6], 128, 128, 8
    $region9: #{tpu_custom_call.1} parent=1 // pred_fallthru
      _
    // Predicated region
    $region10: #{tpu_custom_call.1} parent=1 // pred_check
      _
    $region11: #{tpu_custom_call.1} parent=1 // pred_check_branch
      %35 = sbr.rel (0) target = $region13
    $region12: #{tpu_custom_call.1} parent=1 // pred_region
      %36 = dma.done [#allocation3], 2048
    $region13: #{tpu_custom_call.1} parent=1 // pred_fallthru
      _
    // Predicated region
    $region14: #{tpu_custom_call.1} parent=1 // pred_check
      _
    $region15: #{tpu_custom_call.1} parent=1 // pred_check_branch
      %38 = sbr.rel (0) target = $region17
    $region16: #{tpu_custom_call.1} parent=1 // pred_region
      %39 = dma.done [#allocation6], 2048
    $region17: #{tpu_custom_call.1} parent=1 // pred_fallthru
      _
    %v40 = vld [vmem:[#allocation2] sm:$0xf]
    %v41 = vld [vmem:[#allocation2 + $0x4] sm:$0xf]
    %v42 = vld [vmem:[#allocation2 + $0x8] sm:$0xf]
    %v43 = vld [vmem:[#allocation2 + $0xc] sm:$0xf]
    %v44 = vld [vmem:[#allocation2 + $0x10] sm:$0xf]
    %v45 = vld [vmem:[#allocation2 + $0x14] sm:$0xf]
    %v46 = vld [vmem:[#allocation2 + $0x18] sm:$0xf]
    %v47 = vld [vmem:[#allocation2 + $0x1c] sm:$0xf]
    %v48 = vld [vmem:[#allocation2 + $0x20] sm:$0xf]
    %v49 = vld [vmem:[#allocation2 + $0x24] sm:$0xf]
    %v50 = vld [vmem:[#allocation2 + $0x28] sm:$0xf]
    %v51 = vld [vmem:[#allocation2 + $0x2c] sm:$0xf]
    %v52 = vld [vmem:[#allocation2 + $0x30] sm:$0xf]
    %v53 = vld [vmem:[#allocation2 + $0x34] sm:$0xf]
    %v54 = vld [vmem:[#allocation2 + $0x38] sm:$0xf]
    %v55 = vld [vmem:[#allocation2 + $0x3c] sm:$0xf]
    %v56 = vld [vmem:[#allocation2 + $0x40] sm:$0xf]
    %v57 = vld [vmem:[#allocation2 + $0x44] sm:$0xf]
    %v58 = vld [vmem:[#allocation2 + $0x48] sm:$0xf]
    %v59 = vld [vmem:[#allocation2 + $0x4c] sm:$0xf]
    %v60 = vld [vmem:[#allocation2 + $0x50] sm:$0xf]
    %v61 = vld [vmem:[#allocation2 + $0x54] sm:$0xf]
    %v62 = vld [vmem:[#allocation2 + $0x58] sm:$0xf]
    %v63 = vld [vmem:[#allocation2 + $0x5c] sm:$0xf]
    %v64 = vld [vmem:[#allocation2 + $0x60] sm:$0xf]
    %v65 = vld [vmem:[#allocation2 + $0x64] sm:$0xf]
    %v66 = vld [vmem:[#allocation2 + $0x68] sm:$0xf]
    %v67 = vld [vmem:[#allocation2 + $0x6c] sm:$0xf]
    %v68 = vld [vmem:[#allocation2 + $0x70] sm:$0xf]
    %v69 = vld [vmem:[#allocation2 + $0x74] sm:$0xf]
    %v70 = vld [vmem:[#allocation2 + $0x78] sm:$0xf]
    %v71 = vld [vmem:[#allocation2 + $0x7c] sm:$0xf]
    %v72 = vunpack.c.l.bf16 %v40
    %v73 = vunpack.c.l.bf16 %v41
    %v74 = vunpack.c.l.bf16 %v42
    %v75 = vunpack.c.l.bf16 %v43
    %v76 = vunpack.c.l.bf16 %v44
    %v77 = vunpack.c.l.bf16 %v45
    %v78 = vunpack.c.l.bf16 %v46
    %v79 = vunpack.c.l.bf16 %v47
    %v80 = vunpack.c.l.bf16 %v48
    %v81 = vunpack.c.l.bf16 %v49
    %v82 = vunpack.c.l.bf16 %v50
    %v83 = vunpack.c.l.bf16 %v51
    %v84 = vunpack.c.l.bf16 %v52
    %v85 = vunpack.c.l.bf16 %v53
    %v86 = vunpack.c.l.bf16 %v54
    %v87 = vunpack.c.l.bf16 %v55
    %v88 = vunpack.c.l.bf16 %v56
    %v89 = vunpack.c.l.bf16 %v57
    %v90 = vunpack.c.l.bf16 %v58
    %v91 = vunpack.c.l.bf16 %v59
    %v92 = vunpack.c.l.bf16 %v60
    %v93 = vunpack.c.l.bf16 %v61
    %v94 = vunpack.c.l.bf16 %v62
    %v95 = vunpack.c.l.bf16 %v63
    %v96 = vunpack.c.l.bf16 %v64
    %v97 = vunpack.c.l.bf16 %v65
    %v98 = vunpack.c.l.bf16 %v66
    %v99 = vunpack.c.l.bf16 %v67
    %v100 = vunpack.c.l.bf16 %v68
    %v101 = vunpack.c.l.bf16 %v69
    %v102 = vunpack.c.l.bf16 %v70
    %v103 = vunpack.c.l.bf16 %v71
    %v104 = vld [vmem:[#allocation5] sm:$0xff]
    %v105 = vld [vmem:[#allocation5 + $0x8] sm:$0xff]
    %v106 = vld [vmem:[#allocation5 + $0x10] sm:$0xff]
    %v107 = vld [vmem:[#allocation5 + $0x18] sm:$0xff]
    %v108 = vld [vmem:[#allocation5 + $0x20] sm:$0xff]
    %v109 = vld [vmem:[#allocation5 + $0x28] sm:$0xff]
    %v110 = vld [vmem:[#allocation5 + $0x30] sm:$0xff]
    %v111 = vld [vmem:[#allocation5 + $0x38] sm:$0xff]
    %v112 = vld [vmem:[#allocation5 + $0x40] sm:$0xff]
    %v113 = vld [vmem:[#allocation5 + $0x48] sm:$0xff]
    %v114 = vld [vmem:[#allocation5 + $0x50] sm:$0xff]
    %v115 = vld [vmem:[#allocation5 + $0x58] sm:$0xff]
    %v116 = vld [vmem:[#allocation5 + $0x60] sm:$0xff]
    %v117 = vld [vmem:[#allocation5 + $0x68] sm:$0xff]
    %v118 = vld [vmem:[#allocation5 + $0x70] sm:$0xff]
    %v119 = vld [vmem:[#allocation5 + $0x78] sm:$0xff]
    %120 = vmatprep.subr.mxu0 0.0
    %121 = vmatpush1.msra.mxu0 %v119
    %122 = vmatprep.subr.mxu0 0.0
    %123 = vmatpush1.msra.mxu0 %v118
    %124 = vmatprep.subr.mxu0 0.0
    %125 = vmatpush1.msra.mxu0 %v117
    %126 = vmatprep.subr.mxu0 0.0
    %127 = vmatpush1.msra.mxu0 %v116
    %128 = vmatprep.subr.mxu0 0.0
    %129 = vmatpush1.msra.mxu0 %v115
    %130 = vmatprep.subr.mxu0 0.0
    %131 = vmatpush1.msra.mxu0 %v114
    %132 = vmatprep.subr.mxu0 0.0
    %133 = vmatpush1.msra.mxu0 %v113
    %134 = vmatprep.subr.mxu0 0.0
    %135 = vmatpush1.msra.mxu0 %v112
    %136 = vmatprep.subr.mxu0 0.0
    %137 = vmatpush1.msra.mxu0 %v111
    %138 = vmatprep.subr.mxu0 0.0
    %139 = vmatpush1.msra.mxu0 %v110
    %140 = vmatprep.subr.mxu0 0.0
    %141 = vmatpush1.msra.mxu0 %v109
    %142 = vmatprep.subr.mxu0 0.0
    %143 = vmatpush1.msra.mxu0 %v108
    %144 = vmatprep.subr.mxu0 0.0
    %145 = vmatpush1.msra.mxu0 %v107
    %146 = vmatprep.subr.mxu0 0.0
    %147 = vmatpush1.msra.mxu0 %v106
    %148 = vmatprep.subr.mxu0 0.0
    %149 = vmatpush1.msra.mxu0 %v105
    %150 = vmatprep.subr.mxu0 0.0
    %151 = vmatpush1.msra.mxu0 %v104
    %152 = vmatprep.subr.mxu0 0.0
    %153 = vmatpush2.msra.mxu0 0.0
    %154 = vmatprep.subr.mxu0 0.0
    %155 = vmatpush2.msra.mxu0 0.0
    %156 = vmatprep.subr.mxu0 0.0
    %157 = vmatpush2.msra.mxu0 0.0
    %158 = vmatprep.subr.mxu0 0.0
    %159 = vmatpush2.msra.mxu0 0.0
    %160 = vmatprep.subr.mxu0 0.0
    %161 = vmatpush2.msra.mxu0 0.0
    %162 = vmatprep.subr.mxu0 0.0
    %163 = vmatpush2.msra.mxu0 0.0
    %164 = vmatprep.subr.mxu0 0.0
    %165 = vmatpush2.msra.mxu0 0.0
    %166 = vmatprep.subr.mxu0 0.0
    %167 = vmatpush2.msra.mxu0 0.0
    %168 = vmatprep.subr.mxu0 0.0
    %169 = vmatpush2.msra.mxu0 0.0
    %170 = vmatprep.subr.mxu0 0.0
    %171 = vmatpush2.msra.mxu0 0.0
    %172 = vmatprep.subr.mxu0 0.0
    %173 = vmatpush2.msra.mxu0 0.0
    %174 = vmatprep.subr.mxu0 0.0
    %175 = vmatpush2.msra.mxu0 0.0
    %176 = vmatprep.subr.mxu0 0.0
    %177 = vmatpush2.msra.mxu0 0.0
    %178 = vmatprep.subr.mxu0 0.0
    %179 = vmatpush2.msra.mxu0 0.0
    %180 = vmatprep.subr.mxu0 0.0
    %181 = vmatpush2.msra.mxu0 0.0
    %182 = vmatprep.subr.mxu0 0.0
    %183 = vmatpush2.msra.mxu0 0.0
    %184 = vmatprep.mubr.f32.mxu0 0.0
    %185 = vmatmul.mubr.f32.gmra.mxu0 %v72
    %v186 = vpop.f32.mrf.mxu0
    %v187 = vadd.f32 0.0, %v186
    %v188 = vpop.f32.mrf.mxu0
    %189 = vmatprep.mubr.f32.mxu0 0.0
    %190 = vmatmul.mubr.f32.gmra.mxu0 %v73
    %v191 = vpop.f32.mrf.mxu0
    %v192 = vadd.f32 0.0, %v191
    %v193 = vpop.f32.mrf.mxu0
    %194 = vmatprep.mubr.f32.mxu0 0.0
    %195 = vmatmul.mubr.f32.gmra.mxu0 %v74
    %v196 = vpop.f32.mrf.mxu0
    %v197 = vadd.f32 0.0, %v196
    %v198 = vpop.f32.mrf.mxu0
    %199 = vmatprep.mubr.f32.mxu0 0.0
    %200 = vmatmul.mubr.f32.gmra.mxu0 %v75
    %v201 = vpop.f32.mrf.mxu0
    %v202 = vadd.f32 0.0, %v201
    %v203 = vpop.f32.mrf.mxu0
    %204 = vmatprep.mubr.f32.mxu0 0.0
    %205 = vmatmul.mubr.f32.gmra.mxu0 %v76
    %v206 = vpop.f32.mrf.mxu0
    %v207 = vadd.f32 0.0, %v206
    %v208 = vpop.f32.mrf.mxu0
    %209 = vmatprep.mubr.f32.mxu0 0.0
    %210 = vmatmul.mubr.f32.gmra.mxu0 %v77
    %v211 = vpop.f32.mrf.mxu0
    %v212 = vadd.f32 0.0, %v211
    %v213 = vpop.f32.mrf.mxu0
    %214 = vmatprep.mubr.f32.mxu0 0.0
    %215 = vmatmul.mubr.f32.gmra.mxu0 %v78
    %v216 = vpop.f32.mrf.mxu0
    %v217 = vadd.f32 0.0, %v216
    %v218 = vpop.f32.mrf.mxu0
    %219 = vmatprep.mubr.f32.mxu0 0.0
    %220 = vmatmul.mubr.f32.gmra.mxu0 %v79
    %v221 = vpop.f32.mrf.mxu0
    %v222 = vadd.f32 0.0, %v221
    %v223 = vpop.f32.mrf.mxu0
    %224 = vmatprep.mubr.f32.mxu0 0.0
    %225 = vmatmul.mubr.f32.gmra.mxu0 %v80
    %v226 = vpop.f32.mrf.mxu0
    %v227 = vadd.f32 0.0, %v226
    %v228 = vpop.f32.mrf.mxu0
    %229 = vmatprep.mubr.f32.mxu0 0.0
    %230 = vmatmul.mubr.f32.gmra.mxu0 %v81
    %v231 = vpop.f32.mrf.mxu0
    %v232 = vadd.f32 0.0, %v231
    %v233 = vpop.f32.mrf.mxu0
    %234 = vmatprep.mubr.f32.mxu0 0.0
    %235 = vmatmul.mubr.f32.gmra.mxu0 %v82
    %v236 = vpop.f32.mrf.mxu0
    %v237 = vadd.f32 0.0, %v236
    %v238 = vpop.f32.mrf.mxu0
    %239 = vmatprep.mubr.f32.mxu0 0.0
    %240 = vmatmul.mubr.f32.gmra.mxu0 %v83
    %v241 = vpop.f32.mrf.mxu0
    %v242 = vadd.f32 0.0, %v241
    %v243 = vpop.f32.mrf.mxu0
    %244 = vmatprep.mubr.f32.mxu0 0.0
    %245 = vmatmul.mubr.f32.gmra.mxu0 %v84
    %v246 = vpop.f32.mrf.mxu0
    %v247 = vadd.f32 0.0, %v246
    %v248 = vpop.f32.mrf.mxu0
    %249 = vmatprep.mubr.f32.mxu0 0.0
    %250 = vmatmul.mubr.f32.gmra.mxu0 %v85
    %v251 = vpop.f32.mrf.mxu0
    %v252 = vadd.f32 0.0, %v251
    %v253 = vpop.f32.mrf.mxu0
    %254 = vmatprep.mubr.f32.mxu0 0.0
    %255 = vmatmul.mubr.f32.gmra.mxu0 %v86
    %v256 = vpop.f32.mrf.mxu0
    %v257 = vadd.f32 0.0, %v256
    %v258 = vpop.f32.mrf.mxu0
    %259 = vmatprep.mubr.f32.mxu0 0.0
    %260 = vmatmul.mubr.f32.gmra.mxu0 %v87
    %v261 = vpop.f32.mrf.mxu0
    %v262 = vadd.f32 0.0, %v261
    %v263 = vpop.f32.mrf.mxu0
    %264 = vmatprep.mubr.f32.mxu0 0.0
    %265 = vmatmul.mubr.f32.gmra.mxu0 %v88
    %v266 = vpop.f32.mrf.mxu0
    %v267 = vadd.f32 0.0, %v266
    %v268 = vpop.f32.mrf.mxu0
    %269 = vmatprep.mubr.f32.mxu0 0.0
    %270 = vmatmul.mubr.f32.gmra.mxu0 %v89
    %v271 = vpop.f32.mrf.mxu0
    %v272 = vadd.f32 0.0, %v271
    %v273 = vpop.f32.mrf.mxu0
    %274 = vmatprep.mubr.f32.mxu0 0.0
    %275 = vmatmul.mubr.f32.gmra.mxu0 %v90
    %v276 = vpop.f32.mrf.mxu0
    %v277 = vadd.f32 0.0, %v276
    %v278 = vpop.f32.mrf.mxu0
    %279 = vmatprep.mubr.f32.mxu0 0.0
    %280 = vmatmul.mubr.f32.gmra.mxu0 %v91
    %v281 = vpop.f32.mrf.mxu0
    %v282 = vadd.f32 0.0, %v281
    %v283 = vpop.f32.mrf.mxu0
    %284 = vmatprep.mubr.f32.mxu0 0.0
    %285 = vmatmul.mubr.f32.gmra.mxu0 %v92
    %v286 = vpop.f32.mrf.mxu0
    %v287 = vadd.f32 0.0, %v286
    %v288 = vpop.f32.mrf.mxu0
    %289 = vmatprep.mubr.f32.mxu0 0.0
    %290 = vmatmul.mubr.f32.gmra.mxu0 %v93
    %v291 = vpop.f32.mrf.mxu0
    %v292 = vadd.f32 0.0, %v291
    %v293 = vpop.f32.mrf.mxu0
    %294 = vmatprep.mubr.f32.mxu0 0.0
    %295 = vmatmul.mubr.f32.gmra.mxu0 %v94
    %v296 = vpop.f32.mrf.mxu0
    %v297 = vadd.f32 0.0, %v296
    %v298 = vpop.f32.mrf.mxu0
    %299 = vmatprep.mubr.f32.mxu0 0.0
    %300 = vmatmul.mubr.f32.gmra.mxu0 %v95
    %v301 = vpop.f32.mrf.mxu0
    %v302 = vadd.f32 0.0, %v301
    %v303 = vpop.f32.mrf.mxu0
    %304 = vmatprep.mubr.f32.mxu0 0.0
    %305 = vmatmul.mubr.f32.gmra.mxu0 %v96
    %v306 = vpop.f32.mrf.mxu0
    %v307 = vadd.f32 0.0, %v306
    %v308 = vpop.f32.mrf.mxu0
    %309 = vmatprep.mubr.f32.mxu0 0.0
    %310 = vmatmul.mubr.f32.gmra.mxu0 %v97
    %v311 = vpop.f32.mrf.mxu0
    %v312 = vadd.f32 0.0, %v311
    %v313 = vpop.f32.mrf.mxu0
    %314 = vmatprep.mubr.f32.mxu0 0.0
    %315 = vmatmul.mubr.f32.gmra.mxu0 %v98
    %v316 = vpop.f32.mrf.mxu0
    %v317 = vadd.f32 0.0, %v316
    %v318 = vpop.f32.mrf.mxu0
    %319 = vmatprep.mubr.f32.mxu0 0.0
    %320 = vmatmul.mubr.f32.gmra.mxu0 %v99
    %v321 = vpop.f32.mrf.mxu0
    %v322 = vadd.f32 0.0, %v321
    %v323 = vpop.f32.mrf.mxu0
    %324 = vmatprep.mubr.f32.mxu0 0.0
    %325 = vmatmul.mubr.f32.gmra.mxu0 %v100
    %v326 = vpop.f32.mrf.mxu0
    %v327 = vadd.f32 0.0, %v326
    %v328 = vpop.f32.mrf.mxu0
    %329 = vmatprep.mubr.f32.mxu0 0.0
    %330 = vmatmul.mubr.f32.gmra.mxu0 %v101
    %v331 = vpop.f32.mrf.mxu0
    %v332 = vadd.f32 0.0, %v331
    %v333 = vpop.f32.mrf.mxu0
    %334 = vmatprep.mubr.f32.mxu0 0.0
    %335 = vmatmul.mubr.f32.gmra.mxu0 %v102
    %v336 = vpop.f32.mrf.mxu0
    %v337 = vadd.f32 0.0, %v336
    %v338 = vpop.f32.mrf.mxu0
    %339 = vmatprep.mubr.f32.mxu0 0.0
    %340 = vmatmul.mubr.f32.gmra.mxu0 %v103
    %v341 = vpop.f32.mrf.mxu0
    %v342 = vadd.f32 0.0, %v341
    %v343 = vpop.f32.mrf.mxu0
    %344 = vdwg.mxu0
    %v345 = vpack.c.bf16 %v192, %v187
    %v346 = vpack.c.bf16 %v202, %v197
    %v347 = vpack.c.bf16 %v212, %v207
    %v348 = vpack.c.bf16 %v222, %v217
    %v349 = vpack.c.bf16 %v232, %v227
    %v350 = vpack.c.bf16 %v242, %v237
    %v351 = vpack.c.bf16 %v252, %v247
    %v352 = vpack.c.bf16 %v262, %v257
    %v353 = vpack.c.bf16 %v272, %v267
    %v354 = vpack.c.bf16 %v282, %v277
    %v355 = vpack.c.bf16 %v292, %v287
    %v356 = vpack.c.bf16 %v302, %v297
    %v357 = vpack.c.bf16 %v312, %v307
    %v358 = vpack.c.bf16 %v322, %v317
    %v359 = vpack.c.bf16 %v332, %v327
    %v360 = vpack.c.bf16 %v342, %v337
    %v377 = vunpack.c.l.b16 %v345
    %v378 = vunpack.c.h.b16 %v345
    %v379 = vunpack.c.l.b16 %v346
    %v380 = vunpack.c.h.b16 %v346
    %v381 = vunpack.c.l.b16 %v347
    %v382 = vunpack.c.h.b16 %v347
    %v383 = vunpack.c.l.b16 %v348
    %v384 = vunpack.c.h.b16 %v348
    %v385 = vunpack.c.l.b16 %v349
    %v386 = vunpack.c.h.b16 %v349
    %v387 = vunpack.c.l.b16 %v350
    %v388 = vunpack.c.h.b16 %v350
    %v389 = vunpack.c.l.b16 %v351
    %v390 = vunpack.c.h.b16 %v351
    %v391 = vunpack.c.l.b16 %v352
    %v392 = vunpack.c.h.b16 %v352
    %v393 = vunpack.c.l.b16 %v353
    %v394 = vunpack.c.h.b16 %v353
    %v395 = vunpack.c.l.b16 %v354
    %v396 = vunpack.c.h.b16 %v354
    %v397 = vunpack.c.l.b16 %v355
    %v398 = vunpack.c.h.b16 %v355
    %v399 = vunpack.c.l.b16 %v356
    %v400 = vunpack.c.h.b16 %v356
    %v401 = vunpack.c.l.b16 %v357
    %v402 = vunpack.c.h.b16 %v357
    %v403 = vunpack.c.l.b16 %v358
    %v404 = vunpack.c.h.b16 %v358
    %v405 = vunpack.c.l.b16 %v359
    %v406 = vunpack.c.h.b16 %v359
    %v407 = vunpack.c.l.b16 %v360
    %v408 = vunpack.c.h.b16 %v360
    %v409 = vpack.c.b16 %v377, %v377
    %v410 = vpack.c.b16 %v378, %v378
    %v411 = vpack.c.b16 %v379, %v379
    %v412 = vpack.c.b16 %v380, %v380
    %v413 = vpack.c.b16 %v381, %v381
    %v414 = vpack.c.b16 %v382, %v382
    %v415 = vpack.c.b16 %v383, %v383
    %v416 = vpack.c.b16 %v384, %v384
    %v417 = vpack.c.b16 %v385, %v385
    %v418 = vpack.c.b16 %v386, %v386
    %v419 = vpack.c.b16 %v387, %v387
    %v420 = vpack.c.b16 %v388, %v388
    %v421 = vpack.c.b16 %v389, %v389
    %v422 = vpack.c.b16 %v390, %v390
    %v423 = vpack.c.b16 %v391, %v391
    %v424 = vpack.c.b16 %v392, %v392
    %v425 = vpack.c.b16 %v393, %v393
    %v426 = vpack.c.b16 %v394, %v394
    %v427 = vpack.c.b16 %v395, %v395
    %v428 = vpack.c.b16 %v396, %v396
    %v429 = vpack.c.b16 %v397, %v397
    %v430 = vpack.c.b16 %v398, %v398
    %v431 = vpack.c.b16 %v399, %v399
    %v432 = vpack.c.b16 %v400, %v400
    %v433 = vpack.c.b16 %v401, %v401
    %v434 = vpack.c.b16 %v402, %v402
    %v435 = vpack.c.b16 %v403, %v403
    %v436 = vpack.c.b16 %v404, %v404
    %v437 = vpack.c.b16 %v405, %v405
    %v438 = vpack.c.b16 %v406, %v406
    %v439 = vpack.c.b16 %v407, %v407
    %v440 = vpack.c.b16 %v408, %v408
    %473 = vst [vmem:[#allocation7] sm:$0xf] %v409
    %474 = vst [vmem:[#allocation7 + $0x4] sm:$0xf] %v410
    %475 = vst [vmem:[#allocation7 + $0x8] sm:$0xf] %v411
    %476 = vst [vmem:[#allocation7 + $0xc] sm:$0xf] %v412
    %477 = vst [vmem:[#allocation7 + $0x10] sm:$0xf] %v413
    %478 = vst [vmem:[#allocation7 + $0x14] sm:$0xf] %v414
    %479 = vst [vmem:[#allocation7 + $0x18] sm:$0xf] %v415
    %480 = vst [vmem:[#allocation7 + $0x1c] sm:$0xf] %v416
    %481 = vst [vmem:[#allocation7 + $0x20] sm:$0xf] %v417
    %482 = vst [vmem:[#allocation7 + $0x24] sm:$0xf] %v418
    %483 = vst [vmem:[#allocation7 + $0x28] sm:$0xf] %v419
    %484 = vst [vmem:[#allocation7 + $0x2c] sm:$0xf] %v420
    %485 = vst [vmem:[#allocation7 + $0x30] sm:$0xf] %v421
    %486 = vst [vmem:[#allocation7 + $0x34] sm:$0xf] %v422
    %487 = vst [vmem:[#allocation7 + $0x38] sm:$0xf] %v423
    %488 = vst [vmem:[#allocation7 + $0x3c] sm:$0xf] %v424
    %489 = vst [vmem:[#allocation7 + $0x40] sm:$0xf] %v425
    %490 = vst [vmem:[#allocation7 + $0x44] sm:$0xf] %v426
    %491 = vst [vmem:[#allocation7 + $0x48] sm:$0xf] %v427
    %492 = vst [vmem:[#allocation7 + $0x4c] sm:$0xf] %v428
    %493 = vst [vmem:[#allocation7 + $0x50] sm:$0xf] %v429
    %494 = vst [vmem:[#allocation7 + $0x54] sm:$0xf] %v430
    %495 = vst [vmem:[#allocation7 + $0x58] sm:$0xf] %v431
    %496 = vst [vmem:[#allocation7 + $0x5c] sm:$0xf] %v432
    %497 = vst [vmem:[#allocation7 + $0x60] sm:$0xf] %v433
    %498 = vst [vmem:[#allocation7 + $0x64] sm:$0xf] %v434
    %499 = vst [vmem:[#allocation7 + $0x68] sm:$0xf] %v435
    %500 = vst [vmem:[#allocation7 + $0x6c] sm:$0xf] %v436
    %501 = vst [vmem:[#allocation7 + $0x70] sm:$0xf] %v437
    %502 = vst [vmem:[#allocation7 + $0x74] sm:$0xf] %v438
    %503 = vst [vmem:[#allocation7 + $0x78] sm:$0xf] %v439
    %504 = vst [vmem:[#allocation7 + $0x7c] sm:$0xf] %v440
    // Predicated region
    $region18: #{tpu_custom_call.1} parent=1 // pred_check
      _
    $region19: #{tpu_custom_call.1} parent=1 // pred_check_branch
      %506 = sbr.rel (0) target = $region21
    $region20: #{tpu_custom_call.1} parent=1 // pred_region
      %s508 = ssub.s32 2048, 2048
      %509 = vsyncadd [#allocation4], %s508
      %s510 = sshll.u32 [#allocation7], 4
      %s511 = int_to_ptr.vmem [resolvable:$true] %s510
      %516 = dma.vmem_to_hbm [thread:$0]  %s511, 2048, %s2, [#allocation4], 64, 64, 4
    $region21: #{tpu_custom_call.1} parent=1 // pred_fallthru
      _
    // Predicated region
    $region22: #{tpu_custom_call.1} parent=1 // pred_check
      _
    $region23: #{tpu_custom_call.1} parent=1 // pred_check_branch
      %518 = sbr.rel (0) target = $region25
    $region24: #{tpu_custom_call.1} parent=1 // pred_region
      %519 = dma.done [#allocation4], 2048
    $region25: #{tpu_custom_call.1} parent=1 // pred_fallthru
      _
    %520 = vsyncpa [#allocation3], 1
    %521 = vsyncpa [#allocation6], 1
    %522 = vsyncpa [#allocation4], 1

</llo_original>
